<compile_context>
chip_gen: v6e
topology: v6e:2x2x1
jax: 0.10.0
libtpu: 0.0.40
codegen_flags: <defaults>
</compile_context>

<pallas_src>
import functools

import jax
import jax.numpy as jnp
from jax.experimental import pallas as pl
from jax.experimental.pallas import tpu as pltpu


def _round_up(n, m):
    return ((n + m - 1) // m) * m


def _cdiv(a, b):
    return (a + b - 1) // b


def _tpu_vmem_capacity():
    try:
        info = pltpu.get_tpu_info()
        cap = getattr(info, "vmem_capacity_bytes", None)
        if cap:
            return int(cap)
    except Exception:
        pass
    return 128 << 20  # v5e/v6e default


def ffn_kernel(x_ref, w1_ref, b1_ref, w2_ref, pack_ref, o_ref, acc_ref,
               *, d_in, eps):
    """Grid = (row_tiles, hid_chunks).  Hidden-dim axis is the reduction."""
    k = pl.program_id(1)
    nk = pl.num_programs(1)

    @pl.when(k == 0)
    def _():
        acc_ref[...] = jnp.zeros_like(acc_ref)

    # ---- w_1 chunk: Linear(d_in -> tk) + ReLU (bf16 MXU, f32 accumulate) ----
    x_bf = x_ref[...].astype(jnp.bfloat16)
    h = jnp.dot(x_bf, w1_ref[...], preferred_element_type=jnp.float32)
    h = jnp.maximum(h + b1_ref[...], 0.0)

    # ---- w_2 chunk: accumulate Linear(tk -> d_in) into f32 scratch ----
    acc_ref[...] += jnp.dot(h.astype(jnp.bfloat16), w2_ref[...],
                            preferred_element_type=jnp.float32)

    # ---- finalize: bias + residual + LayerNorm on the last hidden chunk ----
    @pl.when(k == nk - 1)
    def _():
        x_f32 = x_ref[...].astype(jnp.float32)
        b2 = pack_ref[0:1, :]
        gamma = pack_ref[1:2, :]
        beta = pack_ref[2:3, :]

        y = acc_ref[...] + b2 + x_f32

        d_in_p = y.shape[-1]
        inv_n = 1.0 / d_in
        if d_in == d_in_p:
            # lane-dense feature dim: no mask needed
            mean = jnp.sum(y, axis=-1, keepdims=True) * inv_n
            centered = y - mean
        else:
            lane = jax.lax.broadcasted_iota(jnp.int32, (1, d_in_p), 1)
            valid = (lane < d_in).astype(jnp.float32)
            mean = jnp.sum(y * valid, axis=-1, keepdims=True) * inv_n
            centered = (y - mean) * valid
        var = jnp.sum(centered * centered, axis=-1, keepdims=True) * inv_n
        y_norm = centered * jax.lax.rsqrt(var + eps)
        o_ref[...] = (y_norm * gamma + beta).astype(o_ref.dtype)


def feed_forward(x, w1, b1, w2, b2, gamma, beta, *, tile_m=None, hid_chunk=1024):
    """x: [batch, seq, d_in] float32. Returns same shape/dtype."""
    batch, seq, d_in = x.shape
    d_hid = w1.shape[1]
    rows = batch * seq

    # Lane-dense feature dim; hidden dim padded to a multiple of the chunk size.
    d_in_p = _round_up(d_in, 128)
    tk = min(_round_up(d_hid, 128), hid_chunk)
    d_hid_p = _round_up(d_hid, tk)
    nk = d_hid_p // tk

    vmem_cap = _tpu_vmem_capacity()
    vmem_limit = max(32 << 20, min((vmem_cap * 3) // 4, 112 << 20))
    if tile_m is None:
        tile_m = 512 if vmem_cap >= (100 << 20) else 256

    # Row tile: big when there are many rows; otherwise split into >=2 blocks so
    # a 2-TensorCore chip (v7x) keeps both cores busy.  No host-side row pad.
    if rows > tile_m:
        tm = tile_m
    elif rows > 8:
        tm = _round_up(_cdiv(rows, 2), 8)
    else:
        tm = rows
    grid_m = _cdiv(rows, tm)

    x2d = x.reshape(rows, d_in)
    if d_in_p != d_in:
        x2d = jnp.pad(x2d, ((0, 0), (0, d_in_p - d_in)))

    # Weights as bf16 MXU operands; biases / affine stay f32.
    w1_p = jnp.pad(w1, ((0, d_in_p - d_in), (0, d_hid_p - d_hid))).astype(jnp.bfloat16)
    w2_p = jnp.pad(w2, ((0, d_hid_p - d_hid), (0, d_in_p - d_in))).astype(jnp.bfloat16)
    b1_p = jnp.pad(b1, (0, d_hid_p - d_hid)).reshape(1, d_hid_p).astype(jnp.float32)
    pack = jnp.stack([
        jnp.pad(b2, (0, d_in_p - d_in)),
        jnp.pad(gamma, (0, d_in_p - d_in)),
        jnp.pad(beta, (0, d_in_p - d_in)),
    ]).astype(jnp.float32)                                    # (3, d_in_p)

    # Resident (constant index_map) operands: single buffer.  Streamed weight
    # chunks (nk > 1): default double-buffering so DMA overlaps the MXU.
    w_mode = pl.Buffered(1) if nk == 1 else pl.Buffered(2)
    res_mode = pl.Buffered(1)

    flops = 4 * rows * d_in_p * d_hid_p
    bytes_accessed = (x2d.size * 4 + rows * d_in_p * 4
                      + w1_p.size * 2 + w2_p.size * 2
                      + b1_p.size * 4 + pack.size * 4)
    cost = pl.CostEstimate(flops=flops, transcendentals=rows,
                           bytes_accessed=bytes_accessed)

    kernel = functools.partial(ffn_kernel, d_in=d_in, eps=1e-6)

    out2d = pl.pallas_call(
        kernel,
        out_shape=jax.ShapeDtypeStruct((rows, d_in_p), x.dtype),
        grid_spec=pltpu.PrefetchScalarGridSpec(
            num_scalar_prefetch=0,
            grid=(grid_m, nk),
            in_specs=[
                pl.BlockSpec((tm, d_in_p), lambda i, k: (i, 0)),        # x rows
                pl.BlockSpec((d_in_p, tk), lambda i, k: (0, k),
                             pipeline_mode=w_mode),                     # w1 chunk
                pl.BlockSpec((1, tk), lambda i, k: (0, k),
                             pipeline_mode=w_mode),                     # b1 chunk
                pl.BlockSpec((tk, d_in_p), lambda i, k: (k, 0),
                             pipeline_mode=w_mode),                     # w2 chunk
                pl.BlockSpec((3, d_in_p), lambda i, k: (0, 0),
                             pipeline_mode=res_mode),                   # b2/gamma/beta
            ],
            out_specs=pl.BlockSpec((tm, d_in_p), lambda i, k: (i, 0)),
            scratch_shapes=[pltpu.VMEM((tm, d_in_p), jnp.float32)],     # f32 accumulator
        ),
        compiler_params=pltpu.CompilerParams(
            dimension_semantics=("parallel", "arbitrary"),
            vmem_limit_bytes=vmem_limit,
        ),
        cost_estimate=cost,
    )(x2d, w1_p, b1_p, w2_p, pack)

    if d_in_p != d_in:
        out2d = out2d[:, :d_in]
    return out2d.reshape(batch, seq, d_in)


def reference(x, w1, b1, w2, b2, gamma, beta):
    h = jnp.maximum(x @ w1 + b1, 0.0)
    y = h @ w2 + b2 + x
    mean = jnp.mean(y, axis=-1, keepdims=True)
    var = jnp.mean((y - mean) ** 2, axis=-1, keepdims=True)
    return (y - mean) / jnp.sqrt(var + 1e-6) * gamma + beta


if __name__ == "__main__":
    # small shapes implied by the module: d_in, d_hid; x is [batch, seq, d_in]
    batch, seq, d_in, d_hid = 2, 8, 32, 64

    key = jax.random.PRNGKey(0)
    kx, kw1, kb1, kw2, kb2 = jax.random.split(key, 5)

    x = jax.random.normal(kx, (batch, seq, d_in), dtype=jnp.float32)

    # deterministic synthetic parameters (Linear weights stored as (in, out))
    w1 = jax.random.normal(kw1, (d_in, d_hid), dtype=jnp.float32) * 0.1
    b1 = jax.random.normal(kb1, (d_hid,), dtype=jnp.float32) * 0.01
    w2 = jax.random.normal(kw2, (d_hid, d_in), dtype=jnp.float32) * 0.1
    b2 = jax.random.normal(kb2, (d_in,), dtype=jnp.float32) * 0.01
    gamma = jnp.ones((d_in,), dtype=jnp.float32)
    beta = jnp.zeros((d_in,), dtype=jnp.float32)

    out = feed_forward(x, w1, b1, w2, b2, gamma, beta)
    out = jax.block_until_ready(out)

    ref = reference(x, w1, b1, w2, b2, gamma, beta)
    assert out.shape == x.shape and out.dtype == x.dtype
    # bf16 MXU matmuls (f32 accumulate) vs an all-f32 reference -> looser tolerance
    assert jnp.allclose(out, ref, atol=3e-2, rtol=3e-2), "mismatch vs reference"

    print("KERNEL_OK")
</pallas_src>

<mosaic_0001>
module attributes {stable_mosaic.version = 11 : i64} {
  func.func @ffn_kernel(%arg0: i32, %arg1: i32, %arg2: memref<8x128xf32, #tpu.memory_space<vmem>>, %arg3: memref<128x128xbf16, #tpu.memory_space<vmem>>, %arg4: memref<1x128xf32, #tpu.memory_space<vmem>>, %arg5: memref<128x128xbf16, #tpu.memory_space<vmem>>, %arg6: memref<3x128xf32, #tpu.memory_space<vmem>>, %arg7: memref<8x128xf32, #tpu.memory_space<vmem>>, %arg8: memref<8x128xf32, #tpu.memory_space<vmem>>) attributes {dimension_semantics = [#tpu.dimension_semantics<parallel>, #tpu.dimension_semantics<arbitrary>], iteration_bounds = array<i64: 2, 1>, scalar_prefetch = 0 : i64, scratch_operands = 1 : i64, tpu.core_type = #tpu.core_type<tc>, window_params = [{transform_indices = @transform_0, window_bounds = array<i64: 8, 128>}, {pipeline_mode = #tpu.pipeline_mode<synchronous>, transform_indices = @transform_1, window_bounds = array<i64: 128, 128>}, {pipeline_mode = #tpu.pipeline_mode<synchronous>, transform_indices = @transform_2, window_bounds = array<i64: 1, 128>}, {pipeline_mode = #tpu.pipeline_mode<synchronous>, transform_indices = @transform_3, window_bounds = array<i64: 128, 128>}, {pipeline_mode = #tpu.pipeline_mode<synchronous>, transform_indices = @transform_4, window_bounds = array<i64: 3, 128>}, {transform_indices = @transform_5, window_bounds = array<i64: 8, 128>}]} {
    %c0_i32 = arith.constant 0 : i32
    %0 = arith.cmpi eq, %arg1, %c0_i32 : i32
    %1 = arith.extui %0 : i1 to i32
    %c0_i32_0 = arith.constant 0 : i32
    %2 = arith.cmpi ne, %1, %c0_i32_0 : i32
    scf.if %2 {
      %cst_16 = arith.constant 0.000000e+00 : f32
      %21 = vector.broadcast %cst_16 : f32 to vector<8x128xf32>
      %c0_17 = arith.constant 0 : index
      %c0_18 = arith.constant 0 : index
      %22 = vector.load %arg8[%c0_17, %c0_18] : memref<8x128xf32, #tpu.memory_space<vmem>>, vector<8x128xf32>
      tpu.vector_store %arg8[%c0_17, %c0_18], %21 {strides = array<i32>} : memref<8x128xf32, #tpu.memory_space<vmem>>, vector<8x128xf32>,
    } else {
    }
    %c0 = arith.constant 0 : index
    %c0_1 = arith.constant 0 : index
    %3 = vector.load %arg2[%c0, %c0_1] : memref<8x128xf32, #tpu.memory_space<vmem>>, vector<8x128xf32>
    %4 = arith.truncf %3 : vector<8x128xf32> to vector<8x128xbf16>
    %c0_2 = arith.constant 0 : index
    %c0_3 = arith.constant 0 : index
    %5 = vector.load %arg3[%c0_2, %c0_3] : memref<128x128xbf16, #tpu.memory_space<vmem>>, vector<128x128xbf16>
    %cst = arith.constant dense<0.000000e+00> : vector<8x128xf32>
    %6 = tpu.matmul %4, %5, %cst {dimension_numbers = #tpu.dot_dimension_numbers<[1], [0], [0], [1], [0, 0, 1, 1], [], []>} : vector<8x128xbf16>, vector<128x128xbf16>, vector<8x128xf32> -> vector<8x128xf32>
    %c0_4 = arith.constant 0 : index
    %c0_5 = arith.constant 0 : index
    %7 = vector.load %arg4[%c0_4, %c0_5] : memref<1x128xf32, #tpu.memory_space<vmem>>, vector<1x128xf32>
    %8 = vector.broadcast %7 : vector<1x128xf32> to vector<8x128xf32>
    %9 = arith.addf %6, %8 : vector<8x128xf32>
    %cst_6 = arith.constant 0.000000e+00 : f32
    %10 = vector.broadcast %cst_6 : f32 to vector<8x128xf32>
    %11 = arith.maximumf %9, %10 : vector<8x128xf32>
    %c0_7 = arith.constant 0 : index
    %c0_8 = arith.constant 0 : index
    %12 = vector.load %arg8[%c0_7, %c0_8] : memref<8x128xf32, #tpu.memory_space<vmem>>, vector<8x128xf32>
    %13 = arith.truncf %11 : vector<8x128xf32> to vector<8x128xbf16>
    %c0_9 = arith.constant 0 : index
    %c0_10 = arith.constant 0 : index
    %14 = vector.load %arg5[%c0_9, %c0_10] : memref<128x128xbf16, #tpu.memory_space<vmem>>, vector<128x128xbf16>
    %cst_11 = arith.constant dense<0.000000e+00> : vector<8x128xf32>
    %15 = tpu.matmul %13, %14, %cst_11 {dimension_numbers = #tpu.dot_dimension_numbers<[1], [0], [0], [1], [0, 0, 1, 1], [], []>} : vector<8x128xbf16>, vector<128x128xbf16>, vector<8x128xf32> -> vector<8x128xf32>
    %16 = arith.addf %12, %15 : vector<8x128xf32>
    %c0_12 = arith.constant 0 : index
    %c0_13 = arith.constant 0 : index
    %17 = vector.load %arg8[%c0_12, %c0_13] : memref<8x128xf32, #tpu.memory_space<vmem>>, vector<8x128xf32>
    tpu.vector_store %arg8[%c0_12, %c0_13], %16 {strides = array<i32>} : memref<8x128xf32, #tpu.memory_space<vmem>>, vector<8x128xf32>,
    %c0_i32_14 = arith.constant 0 : i32
    %18 = arith.cmpi eq, %arg1, %c0_i32_14 : i32
    %19 = arith.extui %18 : i1 to i32
    %c0_i32_15 = arith.constant 0 : i32
    %20 = arith.cmpi ne, %19, %c0_i32_15 : i32
    scf.if %20 {
      %c0_16 = arith.constant 0 : index
      %c0_17 = arith.constant 0 : index
      %21 = vector.load %arg2[%c0_16, %c0_17] : memref<8x128xf32, #tpu.memory_space<vmem>>, vector<8x128xf32>
      %c0_18 = arith.constant 0 : index
      %c0_19 = arith.constant 0 : index
      %22 = vector.load %arg6[%c0_18, %c0_19] : memref<3x128xf32, #tpu.memory_space<vmem>>, vector<1x128xf32>
      %c1 = arith.constant 1 : index
      %c0_20 = arith.constant 0 : index
      %23 = vector.load %arg6[%c1, %c0_20] : memref<3x128xf32, #tpu.memory_space<vmem>>, vector<1x128xf32>
      %c2 = arith.constant 2 : index
      %c0_21 = arith.constant 0 : index
      %24 = vector.load %arg6[%c2, %c0_21] : memref<3x128xf32, #tpu.memory_space<vmem>>, vector<1x128xf32>
      %c0_22 = arith.constant 0 : index
      %c0_23 = arith.constant 0 : index
      %25 = vector.load %arg8[%c0_22, %c0_23] : memref<8x128xf32, #tpu.memory_space<vmem>>, vector<8x128xf32>
      %26 = vector.broadcast %22 : vector<1x128xf32> to vector<8x128xf32>
      %27 = arith.addf %25, %26 : vector<8x128xf32>
      %28 = arith.addf %27, %21 : vector<8x128xf32>
      %29 = tpu.iota {dimensions = array<i32: 1>} : vector<1x128xi32>
      %c32_i32 = arith.constant 32 : i32
      %30 = vector.broadcast %c32_i32 : i32 to vector<1x128xi32>
      %31 = arith.cmpi slt, %29, %30 : vector<1x128xi32>
      %32 = arith.extui %31 : vector<1x128xi1> to vector<1x128xi32>
      %33 = arith.sitofp %32 : vector<1x128xi32> to vector<1x128xf32>
      %34 = vector.broadcast %33 : vector<1x128xf32> to vector<8x128xf32>
      %35 = arith.mulf %28, %34 : vector<8x128xf32>
      %cst_24 = arith.constant dense<0.000000e+00> : vector<8xf32>
      %36 = vector.multi_reduction <add>, %35, %cst_24 [1] : vector<8x128xf32> to vector<8xf32>
      %37 = vector.shape_cast %36 : vector<8xf32> to vector<8x1xf32>
      %cst_25 = arith.constant 3.125000e-02 : f32
      %38 = vector.broadcast %cst_25 : f32 to vector<8x1xf32>
      %39 = arith.mulf %37, %38 : vector<8x1xf32>
      %40 = vector.broadcast %39 : vector<8x1xf32> to vector<8x128xf32>
      %41 = arith.subf %28, %40 : vector<8x128xf32>
      %42 = vector.broadcast %33 : vector<1x128xf32> to vector<8x128xf32>
      %43 = arith.mulf %41, %42 : vector<8x128xf32>
      %44 = arith.mulf %43, %43 : vector<8x128xf32>
      %cst_26 = arith.constant dense<0.000000e+00> : vector<8xf32>
      %45 = vector.multi_reduction <add>, %44, %cst_26 [1] : vector<8x128xf32> to vector<8xf32>
      %46 = vector.shape_cast %45 : vector<8xf32> to vector<8x1xf32>
      %cst_27 = arith.constant 3.125000e-02 : f32
      %47 = vector.broadcast %cst_27 : f32 to vector<8x1xf32>
      %48 = arith.mulf %46, %47 : vector<8x1xf32>
      %cst_28 = arith.constant 9.99999997E-7 : f32
      %49 = vector.broadcast %cst_28 : f32 to vector<8x1xf32>
      %50 = arith.addf %48, %49 : vector<8x1xf32>
      %51 = math.rsqrt %50 : vector<8x1xf32>
      %52 = vector.broadcast %51 : vector<8x1xf32> to vector<8x128xf32>
      %53 = arith.mulf %43, %52 : vector<8x128xf32>
      %54 = vector.broadcast %23 : vector<1x128xf32> to vector<8x128xf32>
      %55 = arith.mulf %53, %54 : vector<8x128xf32>
      %56 = vector.broadcast %24 : vector<1x128xf32> to vector<8x128xf32>
      %57 = arith.addf %55, %56 : vector<8x128xf32>
      %c0_29 = arith.constant 0 : index
      %c0_30 = arith.constant 0 : index
      %58 = vector.load %arg7[%c0_29, %c0_30] : memref<8x128xf32, #tpu.memory_space<vmem>>, vector<8x128xf32>
      tpu.vector_store %arg7[%c0_29, %c0_30], %57 {strides = array<i32>} : memref<8x128xf32, #tpu.memory_space<vmem>>, vector<8x128xf32>,
    } else {
    }
    return
  }
  func.func @transform_0(%arg0: i32, %arg1: i32) -> (i32, i32) {
    %c0_i32 = arith.constant 0 : i32
    %c0_i32_0 = arith.constant 0 : i32
    return %arg0, %c0_i32 : i32, i32
  }
  func.func @transform_1(%arg0: i32, %arg1: i32) -> (i32, i32) {
    %c0_i32 = arith.constant 0 : i32
    %c0_i32_0 = arith.constant 0 : i32
    return %c0_i32, %arg1 : i32, i32
  }
  func.func @transform_2(%arg0: i32, %arg1: i32) -> (i32, i32) {
    %c0_i32 = arith.constant 0 : i32
    %c0_i32_0 = arith.constant 0 : i32
    return %c0_i32, %arg1 : i32, i32
  }
  func.func @transform_3(%arg0: i32, %arg1: i32) -> (i32, i32) {
    %c0_i32 = arith.constant 0 : i32
    %c0_i32_0 = arith.constant 0 : i32
    return %arg1, %c0_i32 : i32, i32
  }
  func.func @transform_4(%arg0: i32, %arg1: i32) -> (i32, i32) {
    %c0_i32 = arith.constant 0 : i32
    %c0_i32_0 = arith.constant 0 : i32
    %c0_i32_1 = arith.constant 0 : i32
    return %c0_i32, %c0_i32_0 : i32, i32
  }
  func.func @transform_5(%arg0: i32, %arg1: i32) -> (i32, i32) {
    %c0_i32 = arith.constant 0 : i32
    %c0_i32_0 = arith.constant 0 : i32
    return %arg0, %c0_i32 : i32, i32
  }
}

</mosaic_0001>

<llo_original>
// kernel: tpu_custom_call.1
$region0: #{tpu_custom_call.1}
  #allocation0 [shape = 'u32[]', space=smem, size = 0x4, offset = 0x4, fixed_abs, tag = 'smem constant byte address 0x4 - core index']
  #allocation1 [shape = 'u32[144,128]{1,0:T(1,128)}', space=vmem, size = 0x12000, scoped, tag = 'internal scratch']
  #allocation2 [shape = 'f32[8,128]{1,0:T(8,128)}', space=vmem, size = 0x1000, scoped, tag = 'scratch operand']
  %s0 = inlined_call_operand.hbm [shape: f32[16,128], index: 0, kind: input, shape index: {}]
  %s1 = inlined_call_operand.hbm [shape: bf16[128,128], index: 1, kind: input, shape index: {}]
  %s2 = inlined_call_operand.vmem [shape: f32[1,128], index: 2, kind: input, shape index: {}]
  %s3 = inlined_call_operand.hbm [shape: bf16[128,128], index: 3, kind: input, shape index: {}]
  %s4 = inlined_call_operand.vmem [shape: f32[3,128], index: 4, kind: input, shape index: {}]
  %s5 = inlined_call_operand.hbm [shape: f32[16,128], index: 5, kind: output, shape index: {}]
  %s6 = sld [smem:[#allocation0]]
  $region73: #{tpu_custom_call.1} parent=0
    _
  %s8 = ssub.s32 1, %s6
  %s9 = scalar_select 0, %s8, %s6
  $region1: #{tpu_custom_call.1} parent=0
    #allocation3 [shape = 'u8[8192]{0}', space=vmem, size = 0x2000, scoped, tag = 'input window, operand 0']
    #allocation4 [shape = 's32[2]{0}', space=sflag, size = 0x8, scoped, tag = 'scoped memory for tpu_custom_call.1']
    #allocation5 [shape = 's32[2]{0}', space=sflag, size = 0x8, scoped, tag = 'scoped memory for tpu_custom_call.1']
    #allocation6 [shape = 'u8[32768]{0}', space=vmem, size = 0x8000, scoped, tag = 'input window, operand 1, single buffered']
    #allocation7 [shape = 's32[1]{0}', space=sflag, size = 0x4, scoped, tag = 'scoped memory for tpu_custom_call.1']
    #allocation8 [shape = 'u8[32768]{0}', space=vmem, size = 0x8000, scoped, tag = 'input window, operand 3, single buffered']
    #allocation9 [shape = 'u8[8192]{0}', space=vmem, size = 0x2000, scoped, tag = 'output window, operand 0']
    %10 = vsyncpa [#allocation4], 0
    %s11 = scalar_lea.sflag [#allocation4], 1
    %12 = vsyncpa %s11, 0
    %13 = vsyncpa [#allocation7], 0
    %14 = vsyncpa [#allocation5], 0
    %s15 = scalar_lea.sflag [#allocation5], 1
    %16 = vsyncpa %s15, 0
    loop: start=0, step=1, limit=4
    $region2: #{tpu_custom_call.1} parent=1 // loop_pre_header
      _
    $region3: #{tpu_custom_call.1} parent=1 // loop_header
      %s18 = sphi 0, %s22
      %p19 = scmp.ge.s32.totalorder %s18, 4
      %s25 = sphi 0, %s37
      %s26 = sphi 0, %s33
      %s27 = sphi 0, %s25
      %s28 = sphi 0, %s26
      %s29 = sphi 0, %s27
      %s30 = sphi 0, %s28
      %s40 = sphi 0, %s42
      %s43 = sphi 0, %s40
      %s44 = sphi 0, %s43
      %s60 = sphi 0, %s44
      %s66 = sphi 0, %s68
      %s69 = sphi 0, %s66
      %s70 = sphi 0, %s69
      %s86 = sphi 0, %s70
      %s92 = sphi 0, %s94
      %s95 = sphi 0, %s92
      %s96 = sphi 0, %s95
      %s112 = sphi 0, %s96
      %s118 = sphi 0, %s120
      %s121 = sphi 0, %s118
      %s122 = sphi 0, %s121
      %s138 = sphi 0, %s122
      %s142 = sphi 0, %s142
      %s144 = sphi 0, %s142
      %s145 = sphi 0, %s144
      %s159 = sphi 0, %s145
      %s165 = sphi 0, %s167
      %s168 = sphi 0, %s165
      %s169 = sphi 0, %s168
      %s185 = sphi 0, %s169
    $region4: #{tpu_custom_call.1} parent=1 // loop_header_branch
      %21 = sbr.rel (%p19) target = $region8
    $region5: #{tpu_custom_call.1} parent=1 // loop_body
      %s23 = ssub.s32 %s18, 1
      %s24 = ssub.s32 %s18, 2
      %s31 = sadd.s32 1, %s26
      %p32 = scmp.ge.s32.totalorder %s31, 1
      %s33 = scalar_select %p32, 0, %s31
      %s34 = sadd.s32 1, %s25
      %s35 = scalar_select %p32, %s34, %s25
      %p36 = scmp.ge.s32.totalorder %s35, 2
      %s37 = scalar_select %p36, 0, %s35
      %s38 = ssub.s32 %s25, %s37
      %p39 = scmp.eq.s32.totalorder %s38, 0
      %s41 = sadd.s32 %s40, 1
      %s42 = scalar_select %p39, %s40, %s41
      %p45 = pneg %p39
      %p46 = scmp.eq.s32.totalorder %s18, 1
      %p47 = por %p45, %p46
      %p48 = scmp.ne.s32.totalorder %s40, %s43
      %p49 = scmp.eq.s32.totalorder %s18, 0
      %p50 = por %p48, %p49
      %p51 = scmp.ne.s32.totalorder %s40, %s43
      %p52 = scmp.eq.s32.totalorder %s23, 1
      %p53 = por %p51, %p52
      %p54 = scmp.ne.s32.totalorder %s43, %s44
      %p55 = scmp.eq.s32.totalorder %s23, 0
      %p56 = por %p54, %p55
      %p57 = scmp.ne.s32.totalorder %s43, %s44
      %p58 = scmp.eq.s32.totalorder %s24, 1
      %p59 = por %p57, %p58
      %p61 = scmp.ne.s32.totalorder %s44, %s60
      %p62 = scmp.eq.s32.totalorder %s24, 0
      %p63 = por %p61, %p62
      %s64 = ssub.s32 %s26, %s33
      %p65 = scmp.eq.s32.totalorder %s64, 0
      %s67 = sadd.s32 %s66, 1
      %s68 = scalar_select %p65, %s66, %s67
      %p71 = pneg %p65
      %p72 = scmp.eq.s32.totalorder %s18, 1
      %p73 = por %p71, %p72
      %p74 = scmp.ne.s32.totalorder %s66, %s69
      %p75 = scmp.eq.s32.totalorder %s18, 0
      %p76 = por %p74, %p75
      %p77 = scmp.ne.s32.totalorder %s66, %s69
      %p78 = scmp.eq.s32.totalorder %s23, 1
      %p79 = por %p77, %p78
      %p80 = scmp.ne.s32.totalorder %s69, %s70
      %p81 = scmp.eq.s32.totalorder %s23, 0
      %p82 = por %p80, %p81
      %p83 = scmp.ne.s32.totalorder %s69, %s70
      %p84 = scmp.eq.s32.totalorder %s24, 1
      %p85 = por %p83, %p84
      %p87 = scmp.ne.s32.totalorder %s70, %s86
      %p88 = scmp.eq.s32.totalorder %s24, 0
      %p89 = por %p87, %p88
      %s90 = ssub.s32 %s26, %s33
      %p91 = scmp.eq.s32.totalorder %s90, 0
      %s93 = sadd.s32 %s92, 1
      %s94 = scalar_select %p91, %s92, %s93
      %p97 = pneg %p91
      %p98 = scmp.eq.s32.totalorder %s18, 1
      %p99 = por %p97, %p98
      %p100 = scmp.ne.s32.totalorder %s92, %s95
      %p101 = scmp.eq.s32.totalorder %s18, 0
      %p102 = por %p100, %p101
      %p103 = scmp.ne.s32.totalorder %s92, %s95
      %p104 = scmp.eq.s32.totalorder %s23, 1
      %p105 = por %p103, %p104
      %p106 = scmp.ne.s32.totalorder %s95, %s96
      %p107 = scmp.eq.s32.totalorder %s23, 0
      %p108 = por %p106, %p107
      %p109 = scmp.ne.s32.totalorder %s95, %s96
      %p110 = scmp.eq.s32.totalorder %s24, 1
      %p111 = por %p109, %p110
      %p113 = scmp.ne.s32.totalorder %s96, %s112
      %p114 = scmp.eq.s32.totalorder %s24, 0
      %p115 = por %p113, %p114
      %s116 = ssub.s32 %s26, %s33
      %p117 = scmp.eq.s32.totalorder %s116, 0
      %s119 = sadd.s32 %s118, 1
      %s120 = scalar_select %p117, %s118, %s119
      %p123 = pneg %p117
      %p124 = scmp.eq.s32.totalorder %s18, 1
      %p125 = por %p123, %p124
      %p126 = scmp.ne.s32.totalorder %s118, %s121
      %p127 = scmp.eq.s32.totalorder %s18, 0
      %p128 = por %p126, %p127
      %p129 = scmp.ne.s32.totalorder %s118, %s121
      %p130 = scmp.eq.s32.totalorder %s23, 1
      %p131 = por %p129, %p130
      %p132 = scmp.ne.s32.totalorder %s121, %s122
      %p133 = scmp.eq.s32.totalorder %s23, 0
      %p134 = por %p132, %p133
      %p135 = scmp.ne.s32.totalorder %s121, %s122
      %p136 = scmp.eq.s32.totalorder %s24, 1
      %p137 = por %p135, %p136
      %p139 = scmp.ne.s32.totalorder %s122, %s138
      %p140 = scmp.eq.s32.totalorder %s24, 0
      %p141 = por %p139, %p140
      %s143 = sadd.s32 %s142, 1
      %p146 = scmp.eq.s32.totalorder %s18, 1
      %p147 = scmp.ne.s32.totalorder %s142, %s144
      %p148 = scmp.eq.s32.totalorder %s18, 0
      %p149 = por %p147, %p148
      %p150 = scmp.ne.s32.totalorder %s142, %s144
      %p151 = scmp.eq.s32.totalorder %s23, 1
      %p152 = por %p150, %p151
      %p153 = scmp.ne.s32.totalorder %s144, %s145
      %p154 = scmp.eq.s32.totalorder %s23, 0
      %p155 = por %p153, %p154
      %p156 = scmp.ne.s32.totalorder %s144, %s145
      %p157 = scmp.eq.s32.totalorder %s24, 1
      %p158 = por %p156, %p157
      %p160 = scmp.ne.s32.totalorder %s145, %s159
      %p161 = scmp.eq.s32.totalorder %s24, 0
      %p162 = por %p160, %p161
      %s163 = ssub.s32 %s25, %s37
      %p164 = scmp.eq.s32.totalorder %s163, 0
      %s166 = sadd.s32 %s165, 1
      %s167 = scalar_select %p164, %s165, %s166
      %p170 = pneg %p164
      %p171 = scmp.eq.s32.totalorder %s18, 1
      %p172 = por %p170, %p171
      %p173 = scmp.ne.s32.totalorder %s165, %s168
      %p174 = scmp.eq.s32.totalorder %s18, 0
      %p175 = por %p173, %p174
      %p176 = scmp.ne.s32.totalorder %s165, %s168
      %p177 = scmp.eq.s32.totalorder %s23, 1
      %p178 = por %p176, %p177
      %p179 = scmp.ne.s32.totalorder %s168, %s169
      %p180 = scmp.eq.s32.totalorder %s23, 0
      %p181 = por %p179, %p180
      %p182 = scmp.ne.s32.totalorder %s168, %s169
      %p183 = scmp.eq.s32.totalorder %s24, 1
      %p184 = por %p182, %p183
      %p186 = scmp.ne.s32.totalorder %s169, %s185
      %p187 = scmp.eq.s32.totalorder %s24, 0
      %p188 = por %p186, %p187
      %p189 = scmp.le.s32.totalorder 1, %s18
      %p190 = scmp.lt.s32.totalorder %s18, 3
      %p191 = pnand %p189, %p190
      %p192 = pneg %p191
      // Predicated region
      $region9: #{tpu_custom_call.1} parent=5 // pred_check
        _
      $region10: #{tpu_custom_call.1} parent=5 // pred_check_branch
        %194 = sbr.rel (%p191) target = $region12
      $region11: #{tpu_custom_call.1} parent=5 // pred_region
        %s195 = ssub.s32 %s18, 1
        // Predicated region
        $region13: #{tpu_custom_call.1} parent=11 // pred_check
          %p196 = pneg %p82
        $region14: #{tpu_custom_call.1} parent=11 // pred_check_branch
          %198 = sbr.rel (%p196) target = $region16
        $region15: #{tpu_custom_call.1} parent=11 // pred_region
          %s200 = ssub.s32 1024, 1024
          %201 = vsyncadd [#allocation7], %s200
          %s202 = smul.addr %s28, 64
          %s203 = scalar_lea.hbm %s1, %s202
          %s204 = sshll.u32 [#allocation6], 4
          %s205 = int_to_ptr.vmem [resolvable:$true] %s204
          %210 = dma.hbm_to_vmem [thread:$0]  %s203, 1024, %s205, [#allocation7], 64, 64, 4
        $region16: #{tpu_custom_call.1} parent=11 // pred_fallthru
          _
        // Predicated region
        $region17: #{tpu_custom_call.1} parent=11 // pred_check
          %p211 = pneg %p108
        $region18: #{tpu_custom_call.1} parent=11 // pred_check_branch
          %213 = sbr.rel (%p211) target = $region20
        $region19: #{tpu_custom_call.1} parent=11 // pred_region
          %p214 = scmp.lt.s32.totalorder %s28, 0
          %s215 = scalar_select %p214, %s28, 0
          %s216 = scalar_lea.vmem %s2, %s215
        $region20: #{tpu_custom_call.1} parent=11 // pred_fallthru
          _
        // Predicated region
        $region21: #{tpu_custom_call.1} parent=11 // pred_check
          %p217 = pneg %p134
        $region22: #{tpu_custom_call.1} parent=11 // pred_check_branch
          %219 = sbr.rel (%p217) target = $region24
        $region23: #{tpu_custom_call.1} parent=11 // pred_region
          %s220 = smul.u32 16, %s28
          %s222 = ssub.s32 1024, 1024
          %223 = vsyncadd [#allocation7], %s222
          %s224 = smul.addr %s220, 64
          %s225 = scalar_lea.hbm %s3, %s224
          %s226 = sshll.u32 [#allocation8], 4
          %s227 = int_to_ptr.vmem [resolvable:$true] %s226
          %232 = dma.hbm_to_vmem [thread:$0]  %s225, 1024, %s227, [#allocation7], 64, 64, 4
        $region24: #{tpu_custom_call.1} parent=11 // pred_fallthru
          _
        // Predicated region
        $region25: #{tpu_custom_call.1} parent=11 // pred_check
          %p233 = pneg %p155
        $region26: #{tpu_custom_call.1} parent=11 // pred_check_branch
          %235 = sbr.rel (%p233) target = $region28
        $region27: #{tpu_custom_call.1} parent=11 // pred_region
          _
        $region28: #{tpu_custom_call.1} parent=11 // pred_fallthru
          _
      $region12: #{tpu_custom_call.1} parent=5 // pred_fallthru
        _
      %p236 = scmp.lt.s32.totalorder %s18, 2
      // Predicated region
      $region29: #{tpu_custom_call.1} parent=5 // pred_check
        %p237 = pneg %p236
      $region30: #{tpu_custom_call.1} parent=5 // pred_check_branch
        %239 = sbr.rel (%p237) target = $region32
      $region31: #{tpu_custom_call.1} parent=5 // pred_region
        // Predicated region
        $region33: #{tpu_custom_call.1} parent=31 // pred_check
          %p240 = pneg %p50
        $region34: #{tpu_custom_call.1} parent=31 // pred_check_branch
          %242 = sbr.rel (%p240) target = $region36
        $region35: #{tpu_custom_call.1} parent=31 // pred_region
          %s243 = sand.u32 %s40, 1
          %s244 = scalar_lea.sflag [#allocation4], %s243
          %s245 = sand.u32 %s40, 1
          %s246 = smul.addr %s245, 8
          %s247 = scalar_lea.vmem [#allocation3], %s246
          %s249 = ssub.s32 128, 128
          %250 = vsyncadd %s244, %s249
          %s251 = smul.addr %s25, 128
          %s252 = scalar_lea.hbm %s0, %s251
          %s254 = sshll.u32 %s247, 4
          %s255 = int_to_ptr.vmem [resolvable:$true] %s254
          %257 = dma.hbm_to_vmem [thread:$0]  %s252, 128, %s255, %s244
        $region36: #{tpu_custom_call.1} parent=31 // pred_fallthru
          _
      $region32: #{tpu_custom_call.1} parent=5 // pred_fallthru
        _
      %p258 = scmp.le.s32.totalorder 1, %s18
      %p259 = scmp.lt.s32.totalorder %s18, 3
      %p260 = pnand %p258, %p259
      %p261 = pneg %p260
      // Predicated region
      $region37: #{tpu_custom_call.1} parent=5 // pred_check
        _
      $region38: #{tpu_custom_call.1} parent=5 // pred_check_branch
        %263 = sbr.rel (%p260) target = $region40
      $region39: #{tpu_custom_call.1} parent=5 // pred_region
        %s264 = ssub.s32 %s18, 1
        %s265 = sand.u32 %s43, 1
        %s266 = scalar_lea.sflag [#allocation4], %s265
        %s267 = sand.u32 %s43, 1
        %s268 = smul.addr %s267, 8
        %s269 = scalar_lea.vmem [#allocation3], %s268
        // Predicated region
        $region41: #{tpu_custom_call.1} parent=39 // pred_check
          %p270 = pneg %p56
        $region42: #{tpu_custom_call.1} parent=39 // pred_check_branch
          %272 = sbr.rel (%p270) target = $region44
        $region43: #{tpu_custom_call.1} parent=39 // pred_region
          %273 = dma.done %s266, 128
        $region44: #{tpu_custom_call.1} parent=39 // pred_fallthru
          _
        // Predicated region
        $region45: #{tpu_custom_call.1} parent=39 // pred_check
          %p274 = pneg %p82
        $region46: #{tpu_custom_call.1} parent=39 // pred_check_branch
          %276 = sbr.rel (%p274) target = $region48
        $region47: #{tpu_custom_call.1} parent=39 // pred_region
          %277 = dma.done [#allocation7], 1024
        $region48: #{tpu_custom_call.1} parent=39 // pred_fallthru
          _
        // Predicated region
        $region49: #{tpu_custom_call.1} parent=39 // pred_check
          %p278 = pneg %p134
        $region50: #{tpu_custom_call.1} parent=39 // pred_check_branch
          %280 = sbr.rel (%p278) target = $region52
        $region51: #{tpu_custom_call.1} parent=39 // pred_region
          %281 = dma.done [#allocation7], 1024
        $region52: #{tpu_custom_call.1} parent=39 // pred_fallthru
          _
        %s282 = sand.u32 %s43, 1
        %s283 = scalar_lea.sflag [#allocation4], %s282
        %s284 = sand.u32 %s43, 1
        %s285 = smul.addr %s284, 8
        %s286 = scalar_lea.vmem [#allocation3], %s285
        %p287 = pneg %p56
        %p288 = pneg %p53
        %p289 = pneg %p82
        %p290 = pneg %p79
        %p291 = scmp.lt.s32.totalorder %s28, 0
        %s292 = scalar_select %p291, %s28, 0
        %s293 = scalar_lea.vmem %s2, %s292
        %p294 = pneg %p108
        %p295 = pneg %p105
        %p296 = pneg %p134
        %p297 = pneg %p131
        %p298 = pneg %p155
        %p299 = pneg %p152
        %p300 = pneg %p181
        %p301 = pneg %p178
        %s302 = sand.u32 %s168, 1
        %s303 = scalar_lea.sflag [#allocation5], %s302
        %s304 = sand.u32 %s168, 1
        %s305 = smul.addr %s304, 8
        %s306 = scalar_lea.vmem [#allocation9], %s305
        %p307 = scmp.lt.s32.totalorder %s28, 0
        %s308 = scalar_select %p307, %s28, 0
        %s309 = scalar_lea.vmem %s2, %s308
        %s310 = smul.u32 16, %s28
        %p312 = scmp.eq.s32.totalorder %s28, 0
        // Predicated region
        $region53: #{tpu_custom_call.1} parent=39 // pred_check
          %p313 = pneg %p312
        $region54: #{tpu_custom_call.1} parent=39 // pred_check_branch
          %315 = sbr.rel (%p313) target = $region56
        $region55: #{tpu_custom_call.1} parent=39 // pred_region
          %316 = vst [vmem:[#allocation2] sm:$0xff] 0.0
        $region56: #{tpu_custom_call.1} parent=39 // pred_fallthru
          _
        %v317 = vld [vmem:[%s269] sm:$0xff]
        %v318 = vpack.c.bf16 %v317, %v317
        %v319 = vld [vmem:[#allocation6] sm:$0xf]
        %v320 = vld [vmem:[#allocation6 + $0x4] sm:$0xf]
        %v321 = vld [vmem:[#allocation6 + $0x8] sm:$0xf]
        %v322 = vld [vmem:[#allocation6 + $0xc] sm:$0xf]
        %v323 = vld [vmem:[#allocation6 + $0x10] sm:$0xf]
        %v324 = vld [vmem:[#allocation6 + $0x14] sm:$0xf]
        %v325 = vld [vmem:[#allocation6 + $0x18] sm:$0xf]
        %v326 = vld [vmem:[#allocation6 + $0x1c] sm:$0xf]
        %v327 = vld [vmem:[#allocation6 + $0x20] sm:$0xf]
        %v328 = vld [vmem:[#allocation6 + $0x24] sm:$0xf]
        %v329 = vld [vmem:[#allocation6 + $0x28] sm:$0xf]
        %v330 = vld [vmem:[#allocation6 + $0x2c] sm:$0xf]
        %v331 = vld [vmem:[#allocation6 + $0x30] sm:$0xf]
        %v332 = vld [vmem:[#allocation6 + $0x34] sm:$0xf]
        %v333 = vld [vmem:[#allocation6 + $0x38] sm:$0xf]
        %v334 = vld [vmem:[#allocation6 + $0x3c] sm:$0xf]
        %v335 = vld [vmem:[%s309] sm:$0x1]
        %v337 = vlaneseq
        %v338 = vshrl.u32 %v337, 7
        %v339 = vsub.s32 0, %v338
        %v340 = vrot.slane %v335, %v339
        %v358 = vunpack.c.l.b16 %v319
        %v359 = vunpack.c.l.b16 %v320
        %v360 = vunpack.c.l.b16 %v321
        %v361 = vunpack.c.l.b16 %v322
        %v362 = vunpack.c.l.b16 %v323
        %v363 = vunpack.c.l.b16 %v324
        %v364 = vunpack.c.l.b16 %v325
        %v365 = vunpack.c.l.b16 %v326
        %v366 = vunpack.c.l.b16 %v327
        %v367 = vunpack.c.l.b16 %v328
        %v368 = vunpack.c.l.b16 %v329
        %v369 = vunpack.c.l.b16 %v330
        %v370 = vunpack.c.l.b16 %v331
        %v371 = vunpack.c.l.b16 %v332
        %v372 = vunpack.c.l.b16 %v333
        %v373 = vunpack.c.l.b16 %v334
        %v374 = vpack.c.b16 %v359, %v358
        %v375 = vpack.c.b16 %v361, %v360
        %v376 = vpack.c.b16 %v363, %v362
        %v377 = vpack.c.b16 %v365, %v364
        %v378 = vpack.c.b16 %v367, %v366
        %v379 = vpack.c.b16 %v369, %v368
        %v380 = vpack.c.b16 %v371, %v370
        %v381 = vpack.c.b16 %v373, %v372
        %390 = vmatprep.subr.bf16.mxu0 0
        %391 = vmatpush1.bf16.msra.mxu0 %v381
        %392 = vmatprep.subr.bf16.mxu0 0
        %393 = vmatpush1.bf16.msra.mxu0 %v380
        %394 = vmatprep.subr.bf16.mxu0 0
        %395 = vmatpush1.bf16.msra.mxu0 %v379
        %396 = vmatprep.subr.bf16.mxu0 0
        %397 = vmatpush1.bf16.msra.mxu0 %v378
        %398 = vmatprep.subr.bf16.mxu0 0
        %399 = vmatpush1.bf16.msra.mxu0 %v377
        %400 = vmatprep.subr.bf16.mxu0 0
        %401 = vmatpush1.bf16.msra.mxu0 %v376
        %402 = vmatprep.subr.bf16.mxu0 0
        %403 = vmatpush1.bf16.msra.mxu0 %v375
        %404 = vmatprep.subr.bf16.mxu0 0
        %405 = vmatpush1.bf16.msra.mxu0 %v374
        %406 = vmatprep.subr.bf16.mxu0 0
        %407 = vmatpush2.bf16.msra.mxu0 0
        %408 = vmatprep.subr.bf16.mxu0 0
        %409 = vmatpush2.bf16.msra.mxu0 0
        %410 = vmatprep.subr.bf16.mxu0 0
        %411 = vmatpush2.bf16.msra.mxu0 0
        %412 = vmatprep.subr.bf16.mxu0 0
        %413 = vmatpush2.bf16.msra.mxu0 0
        %414 = vmatprep.subr.bf16.mxu0 0
        %415 = vmatpush2.bf16.msra.mxu0 0
        %416 = vmatprep.subr.bf16.mxu0 0
        %417 = vmatpush2.bf16.msra.mxu0 0
        %418 = vmatprep.subr.bf16.mxu0 0
        %419 = vmatpush2.bf16.msra.mxu0 0
        %420 = vmatprep.subr.bf16.mxu0 0
        %421 = vmatpush2.bf16.msra.mxu0 0
        %422 = vmatprep.mubr.bf16.mxu0 0
        %423 = vmatmul.mubr.bf16.gmra.mxu0 %v318
        %v424 = vpop.f32.mrf.mxu0
        %v425 = vadd.f32 %v340, %v424
        %v426 = vpop.f32.mrf.mxu0
        %v427 = vpop.f32.mrf.mxu0
        %v428 = vpop.f32.mrf.mxu0
        %429 = vdwg.mxu0
        %v430 = vmax.f32 %v425, 0.0
        %v431 = vld [vmem:[#allocation2] sm:$0xff]
        %v432 = vpack.c.bf16 %v430, %v430
        %v433 = vld [vmem:[#allocation8] sm:$0xf]
        %v434 = vld [vmem:[#allocation8 + $0x4] sm:$0xf]
        %v435 = vld [vmem:[#allocation8 + $0x8] sm:$0xf]
        %v436 = vld [vmem:[#allocation8 + $0xc] sm:$0xf]
        %v437 = vld [vmem:[#allocation8 + $0x10] sm:$0xf]
        %v438 = vld [vmem:[#allocation8 + $0x14] sm:$0xf]
        %v439 = vld [vmem:[#allocation8 + $0x18] sm:$0xf]
        %v440 = vld [vmem:[#allocation8 + $0x1c] sm:$0xf]
        %v441 = vld [vmem:[#allocation8 + $0x20] sm:$0xf]
        %v442 = vld [vmem:[#allocation8 + $0x24] sm:$0xf]
        %v443 = vld [vmem:[#allocation8 + $0x28] sm:$0xf]
        %v444 = vld [vmem:[#allocation8 + $0x2c] sm:$0xf]
        %v445 = vld [vmem:[#allocation8 + $0x30] sm:$0xf]
        %v446 = vld [vmem:[#allocation8 + $0x34] sm:$0xf]
        %v447 = vld [vmem:[#allocation8 + $0x38] sm:$0xf]
        %v448 = vld [vmem:[#allocation8 + $0x3c] sm:$0xf]
        %v465 = vunpack.c.l.b16 %v433
        %v466 = vunpack.c.l.b16 %v434
        %v467 = vunpack.c.l.b16 %v435
        %v468 = vunpack.c.l.b16 %v436
        %v469 = vunpack.c.l.b16 %v437
        %v470 = vunpack.c.l.b16 %v438
        %v471 = vunpack.c.l.b16 %v439
        %v472 = vunpack.c.l.b16 %v440
        %v473 = vunpack.c.l.b16 %v441
        %v474 = vunpack.c.l.b16 %v442
        %v475 = vunpack.c.l.b16 %v443
        %v476 = vunpack.c.l.b16 %v444
        %v477 = vunpack.c.l.b16 %v445
        %v478 = vunpack.c.l.b16 %v446
        %v479 = vunpack.c.l.b16 %v447
        %v480 = vunpack.c.l.b16 %v448
        %v481 = vpack.c.b16 %v466, %v465
        %v482 = vpack.c.b16 %v468, %v467
        %v483 = vpack.c.b16 %v470, %v469
        %v484 = vpack.c.b16 %v472, %v471
        %v485 = vpack.c.b16 %v474, %v473
        %v486 = vpack.c.b16 %v476, %v475
        %v487 = vpack.c.b16 %v478, %v477
        %v488 = vpack.c.b16 %v480, %v479
        %497 = vmatprep.subr.bf16.mxu0 0
        %498 = vmatpush1.bf16.msra.mxu0 %v488
        %499 = vmatprep.subr.bf16.mxu0 0
        %500 = vmatpush1.bf16.msra.mxu0 %v487
        %501 = vmatprep.subr.bf16.mxu0 0
        %502 = vmatpush1.bf16.msra.mxu0 %v486
        %503 = vmatprep.subr.bf16.mxu0 0
        %504 = vmatpush1.bf16.msra.mxu0 %v485
        %505 = vmatprep.subr.bf16.mxu0 0
        %506 = vmatpush1.bf16.msra.mxu0 %v484
        %507 = vmatprep.subr.bf16.mxu0 0
        %508 = vmatpush1.bf16.msra.mxu0 %v483
        %509 = vmatprep.subr.bf16.mxu0 0
        %510 = vmatpush1.bf16.msra.mxu0 %v482
        %511 = vmatprep.subr.bf16.mxu0 0
        %512 = vmatpush1.bf16.msra.mxu0 %v481
        %513 = vmatprep.subr.bf16.mxu0 0
        %514 = vmatpush2.bf16.msra.mxu0 0
        %515 = vmatprep.subr.bf16.mxu0 0
        %516 = vmatpush2.bf16.msra.mxu0 0
        %517 = vmatprep.subr.bf16.mxu0 0
        %518 = vmatpush2.bf16.msra.mxu0 0
        %519 = vmatprep.subr.bf16.mxu0 0
        %520 = vmatpush2.bf16.msra.mxu0 0
        %521 = vmatprep.subr.bf16.mxu0 0
        %522 = vmatpush2.bf16.msra.mxu0 0
        %523 = vmatprep.subr.bf16.mxu0 0
        %524 = vmatpush2.bf16.msra.mxu0 0
        %525 = vmatprep.subr.bf16.mxu0 0
        %526 = vmatpush2.bf16.msra.mxu0 0
        %527 = vmatprep.subr.bf16.mxu0 0
        %528 = vmatpush2.bf16.msra.mxu0 0
        %529 = vmatprep.mubr.bf16.mxu0 0
        %530 = vmatmul.mubr.bf16.gmra.mxu0 %v432
        %v531 = vpop.f32.mrf.mxu0
        %v532 = vadd.f32 0.0, %v531
        %v533 = vpop.f32.mrf.mxu0
        %v534 = vpop.f32.mrf.mxu0
        %v535 = vpop.f32.mrf.mxu0
        %536 = vdwg.mxu0
        %v537 = vadd.f32 %v431, %v532
        %538 = vst [vmem:[#allocation2] sm:$0xff] %v537
        // Predicated region
        $region57: #{tpu_custom_call.1} parent=39 // pred_check
          %p539 = pneg %p312
        $region58: #{tpu_custom_call.1} parent=39 // pred_check_branch
          %541 = sbr.rel (%p539) target = $region60
        $region59: #{tpu_custom_call.1} parent=39 // pred_region
          %v542 = vld [vmem:[%s269] sm:$0xff]
          %v543 = vld [vmem:[%s4] sm:$0x1]
          %v544 = vld [vmem:[%s4 + $0x1] sm:$0x1]
          %v545 = vld [vmem:[%s4 + $0x2] sm:$0x1]
          %v546 = vld [vmem:[#allocation2] sm:$0xff]
          %v547 = vlaneseq
          %v548 = vshrl.u32 %v547, 7
          %v549 = vsub.s32 0, %v548
          %v550 = vrot.slane %v543, %v549
          %v551 = vadd.f32 %v546, %v550
          %v552 = vadd.f32 %v551, %v542
          %v553 = vlaneseq
          %v554 = vand.u32 %v553, 127
          %vm555 = vcmp.lt.s32.totalorder %v554, 32
          %v556 = vsel %vm555, 1, 0
          %v557 = vcvt.s32.f32 %v556
          %v558 = vmul.f32 %v552, %v557
          %559 = vadd.xlane.f32.xlu0 %v558
          %v560 = vpop.xlane.xlu0 %559
          %v561 = vmul.f32 %v560, 0.03125
          %v562 = vsub.f32 %v552, %v561
          %v563 = vmul.f32 %v562, %v557
          %v564 = vmul.f32 %v563, %v563
          %565 = vadd.xlane.f32.xlu0 %v564
          %v566 = vpop.xlane.xlu0 %565
          %v567 = vmul.f32 %v566, 0.03125
          %v568 = vadd.f32 %v567, 1e-06
          %v569 = vrsqrt.pop %v568
          %v570 = vmul.f32 %v563, %v569
          %v571 = vlaneseq
          %v572 = vshrl.u32 %v571, 7
          %v573 = vsub.s32 0, %v572
          %v574 = vrot.slane %v544, %v573
          %v575 = vmul.f32 %v570, %v574
          %v576 = vlaneseq
          %v577 = vshrl.u32 %v576, 7
          %v578 = vsub.s32 0, %v577
          %v579 = vrot.slane %v545, %v578
          %v580 = vadd.f32 %v575, %v579
          %581 = vst [vmem:[%s306] sm:$0xff] %v580
        $region60: #{tpu_custom_call.1} parent=39 // pred_fallthru
          _
        %s582 = sand.u32 %s168, 1
        %s583 = scalar_lea.sflag [#allocation5], %s582
        %s584 = sand.u32 %s168, 1
        %s585 = smul.addr %s584, 8
        %s586 = scalar_lea.vmem [#allocation9], %s585
        // Predicated region
        $region61: #{tpu_custom_call.1} parent=39 // pred_check
          %p587 = pneg %p178
        $region62: #{tpu_custom_call.1} parent=39 // pred_check_branch
          %589 = sbr.rel (%p587) target = $region64
        $region63: #{tpu_custom_call.1} parent=39 // pred_region
          %s591 = ssub.s32 128, 128
          %592 = vsyncadd %s583, %s591
          %s593 = smul.addr %s27, 128
          %s594 = scalar_lea.hbm %s5, %s593
          %s596 = sshll.u32 %s586, 4
          %s597 = int_to_ptr.vmem [resolvable:$true] %s596
          %599 = dma.vmem_to_hbm [thread:$0]  %s597, 128, %s594, %s583
        $region64: #{tpu_custom_call.1} parent=39 // pred_fallthru
          _
      $region40: #{tpu_custom_call.1} parent=5 // pred_fallthru
        _
      %p600 = scmp.le.s32.totalorder 2, %s18
      // Predicated region
      $region65: #{tpu_custom_call.1} parent=5 // pred_check
        %p601 = pneg %p600
      $region66: #{tpu_custom_call.1} parent=5 // pred_check_branch
        %603 = sbr.rel (%p601) target = $region68
      $region67: #{tpu_custom_call.1} parent=5 // pred_region
        %s604 = ssub.s32 %s18, 2
        // Predicated region
        $region69: #{tpu_custom_call.1} parent=67 // pred_check
          %p605 = pneg %p184
        $region70: #{tpu_custom_call.1} parent=67 // pred_check_branch
          %607 = sbr.rel (%p605) target = $region72
        $region71: #{tpu_custom_call.1} parent=67 // pred_region
          %s608 = sand.u32 %s169, 1
          %s609 = scalar_lea.sflag [#allocation5], %s608
          %s610 = sand.u32 %s169, 1
          %s611 = smul.addr %s610, 8
          %s612 = scalar_lea.vmem [#allocation9], %s611
          %613 = dma.done %s609, 128
        $region72: #{tpu_custom_call.1} parent=67 // pred_fallthru
          _
      $region68: #{tpu_custom_call.1} parent=5 // pred_fallthru
        _
    $region6: #{tpu_custom_call.1} parent=1 // loop_footer
      %s22 = sadd.s32 1, %s18
    $region7: #{tpu_custom_call.1} parent=1 // loop_footer_branch
      %17 = sbr.rel target = $region3
    $region8: #{tpu_custom_call.1} parent=1 // loop_exit
      _
    %614 = vsyncpa [#allocation4], 1
    %s615 = scalar_lea.sflag [#allocation4], 1
    %616 = vsyncpa %s615, 1
    %617 = vsyncpa [#allocation7], 1
    %618 = vsyncpa [#allocation5], 1
    %s619 = scalar_lea.sflag [#allocation5], 1
    %620 = vsyncpa %s619, 1

</llo_original>
